<compile_context>
chip_gen: v7x
topology: tpu7x:2x2x1
jax: 0.10.0
libtpu: 0.0.40
codegen_flags: <defaults>
</compile_context>

<pallas_src>
import functools

import jax
import jax.numpy as jnp
from jax import lax
from jax.experimental import pallas as pl
from jax.experimental.pallas import tpu as pltpu


def _vq_kernel(x_ref, e_ref, et_ref, e2h_ref, q_ref, ind_ref, sse_ref, *,
               n_valid_rows, mask_rows, dist_in_bf16):
    """One tile of `tm` flattened vectors against the full (resident) codebook."""
    tm = x_ref.shape[0]

    x_in = x_ref[...]                              # (tm, dim)  caller dtype
    x = x_in.astype(jnp.float32)                   # f32 copy for gather / SSE

    # score = x @ E - 0.5*|E|^2 ; argmax(score) == argmin(||x - e||^2)
    # (the per-row |x|^2 term is constant per row and dropped).
    if dist_in_bf16:
        # bf16 MXU path (v5e/v6e/v7x are bf16-native).  Only the dot operands
        # are cast; VPU arithmetic stays f32 (v5e has no bf16 VALU).
        xe = jnp.dot(x_in.astype(jnp.bfloat16), e_ref[...],
                     preferred_element_type=jnp.float32)
    else:
        xe = jnp.dot(x, e_ref[...], preferred_element_type=jnp.float32)
    score = xe - e2h_ref[...]                      # (tm, n_embed)  f32

    # argmax over the codebook axis, first index on ties (matches torch .max(1)).
    n_embed = score.shape[1]
    max_s = jnp.max(score, axis=1, keepdims=True)
    iota = lax.broadcasted_iota(jnp.int32, score.shape, 1)
    idx = jnp.min(jnp.where(score == max_s, iota, n_embed), axis=1)   # (tm,)

    # Gather code vectors: one-hot @ embed_t in natural (M,K)x(K,N) order, so
    # the codebook is never transposed per grid step.  Kept in f32 so the
    # gathered values are exact.
    onehot = (iota == idx[:, None]).astype(jnp.float32)               # (tm, n_embed)
    q = jnp.dot(onehot, et_ref[...], preferred_element_type=jnp.float32)  # (tm, dim)

    # Forward value of the straight-through estimator is just q.
    q_ref[...] = q.astype(q_ref.dtype)
    # Lane-dense index store: (1, 1, tm).
    ind_ref[...] = idx[None, None, :]

    # Per-tile SSE column partials (no cross-step dependency -> "parallel" grid).
    d = q - x
    sse_ref[...] = jnp.sum(d * d, axis=0, keepdims=True)[None, :, :]
    if mask_rows:
        # Only the last tile can contain invalid (out-of-bounds / padded) rows;
        # recompute its partial with those rows zeroed so the mean stays exact.
        @pl.when(pl.program_id(0) == pl.num_programs(0) - 1)
        def _():
            row = (pl.program_id(0) * tm
                   + lax.broadcasted_iota(jnp.int32, (tm, 1), 0))
            dm = jnp.where(row < n_valid_rows, d, 0.0)
            sse_ref[...] = jnp.sum(dm * dm, axis=0, keepdims=True)[None, :, :]


def quantize_forward(x, embed, *, tm=256, dist_in_bf16=True):
    """Forward pass of VQVAE Quantize (eval mode).

    x:     (..., dim) channel-last input (any float dtype; fed unconverted).
    embed: (dim, n_embed) codebook.
    Returns (quantize, diff, embed_ind) matching the PyTorch module's forward.

    tm=256 is a safe default across v5e/v6e/v7x; on v6e tm=512 gets closer to
    the HBM roofline.  dist_in_bf16=False gives bit-exact argmin parity.
    """
    dim, n_embed = embed.shape
    orig_shape = x.shape
    orig_dtype = x.dtype

    flat = x.reshape(-1, dim)          # metadata-only reshape for NHWC input
    n = flat.shape[0]

    tm = max(8, (tm // 8) * 8)         # row tiles must be sublane (8) aligned
    if n % 8 == 0:
        rows_in, x_in = n, flat        # common case: no padded HBM copy at all
    else:
        # Rare (spatial dims not multiples of 8): one small row pad so the
        # row-block size stays a multiple of 8 without an oversized block.
        rows_in = -(-n // 8) * 8
        x_in = jnp.pad(flat, ((0, rows_in - n), (0, 0)))
    tm_eff = min(tm, rows_in)
    grid = -(-rows_in // tm_eff)
    # v7x shards a "parallel" grid across its 2 TensorCores: prefer >=2 steps
    # while keeping index stores lane-dense (>=128 rows per tile).
    while grid < 2 and tm_eff >= 256 and tm_eff % 16 == 0:
        tm_eff //= 2
        grid = -(-rows_in // tm_eff)
    mask_rows = (grid * tm_eff) != n

    embed_f32 = embed.astype(jnp.float32)
    # Loop-invariant codebook tensors, computed once in the wrapper:
    #   e_dist : (dim, n_embed) distance-matmul operand (bf16 when dist_in_bf16)
    #   embed_t: (n_embed, dim) f32 gather operand (natural contraction order)
    #   e2h    : (1, n_embed)   0.5 * |E|^2 column norms
    e_dist = embed_f32.astype(jnp.bfloat16) if dist_in_bf16 else embed_f32
    embed_t = embed_f32.T
    e2h = 0.5 * jnp.sum(embed_f32 * embed_f32, axis=0, keepdims=True)

    kernel = functools.partial(
        _vq_kernel, n_valid_rows=n, mask_rows=mask_rows,
        dist_in_bf16=dist_in_bf16)

    q_p, ind_p, sse_p = pl.pallas_call(
        kernel,
        out_shape=(
            jax.ShapeDtypeStruct((n, dim), orig_dtype),          # q, caller dtype
            jax.ShapeDtypeStruct((grid, 1, tm_eff), jnp.int32),  # lane-dense idx
            jax.ShapeDtypeStruct((grid, 1, dim), jnp.float32),   # SSE partials
        ),
        grid_spec=pltpu.PrefetchScalarGridSpec(
            num_scalar_prefetch=0,
            grid=(grid,),
            in_specs=[
                pl.BlockSpec((tm_eff, dim), lambda i: (i, 0)),
                # Constant index_map -> codebook tensors stay resident in VMEM.
                pl.BlockSpec((dim, n_embed), lambda i: (0, 0)),
                pl.BlockSpec((n_embed, dim), lambda i: (0, 0)),
                pl.BlockSpec((1, n_embed), lambda i: (0, 0)),
            ],
            out_specs=[
                pl.BlockSpec((tm_eff, dim), lambda i: (i, 0)),
                pl.BlockSpec((1, 1, tm_eff), lambda i: (i, 0, 0)),
                pl.BlockSpec((1, 1, dim), lambda i: (i, 0, 0)),
            ],
        ),
        # Independent row tiles: on v7x the grid is sharded across both TCs.
        compiler_params=pltpu.CompilerParams(
            dimension_semantics=("parallel",)),
    )(x_in, e_dist, embed_t, e2h)

    quantize = q_p.reshape(orig_shape)                  # already in caller dtype
    embed_ind = ind_p.reshape(-1)[:n].reshape(orig_shape[:-1])
    diff = jnp.sum(sse_p) / jnp.float32(n * dim)
    # TODO(synk): training-mode EMA codebook updates (cluster_size / embed_avg
    # with dist.all_reduce) are stateful cross-device side effects outside the
    # eval forward pass; omitted here.
    # TODO(synk): for n_embed in the multi-thousands, block the n_embed axis
    # with a running (max_score, argmax) carry, set vmem_limit_bytes explicitly
    # (v7x: 64 MiB physical VMEM, v5e: 16 MiB scoped default), and single-buffer
    # the resident codebook inputs (pipeline_mode=pl.Buffered(1)) for headroom.
    return quantize, diff, embed_ind


def _reference_forward(x, embed):
    dim = embed.shape[0]
    e = embed.astype(jnp.float32)
    flat = x.reshape(-1, dim).astype(jnp.float32)
    dist = (jnp.sum(flat ** 2, axis=1, keepdims=True)
            - 2.0 * flat @ e
            + jnp.sum(e ** 2, axis=0, keepdims=True))
    ind = jnp.argmin(dist, axis=1)
    q = jnp.take(e.T, ind, axis=0)
    diff = jnp.mean((q - flat) ** 2)
    return q.reshape(x.shape), diff, ind.reshape(x.shape[:-1])


if __name__ == "__main__":
    key = jax.random.PRNGKey(0)
    kx, ke = jax.random.split(key)

    B, H, W = 2, 8, 8
    dim, n_embed = 64, 128

    x = jax.random.normal(kx, (B, H, W, dim), dtype=jnp.float32)
    # Deterministic codebook init (torch.randn(dim, n_embed) analogue).
    embed = jax.random.normal(ke, (dim, n_embed), dtype=jnp.float32)

    q_ref, diff_ref, ind_ref = _reference_forward(x, embed)

    # Exact-parity path (f32 distance matmul).
    quantize, diff, embed_ind = quantize_forward(x, embed, dist_in_bf16=False)
    jax.block_until_ready((quantize, diff, embed_ind))
    assert jnp.array_equal(embed_ind, ind_ref.astype(embed_ind.dtype))
    assert jnp.allclose(quantize, q_ref, atol=1e-5, rtol=1e-5)
    assert jnp.allclose(diff, diff_ref, atol=1e-5, rtol=1e-5)

    # Default fast path (bf16 distance matmul on the MXU).  Near-tied codes may
    # resolve differently, so these checks are tolerance-based.
    quantize_bf, diff_bf, embed_ind_bf = quantize_forward(x, embed)
    jax.block_until_ready((quantize_bf, diff_bf, embed_ind_bf))
    agree = jnp.mean(
        (embed_ind_bf == ind_ref.astype(embed_ind_bf.dtype)).astype(jnp.float32))
    assert agree >= 0.9
    assert jnp.allclose(diff_bf, diff_ref, rtol=0.2, atol=1e-3)

    print("KERNEL_OK")
</pallas_src>

<mosaic_0001>
module attributes {stable_mosaic.version = 11 : i64} {
  func.func @_vq_kernel(%arg0: i32, %arg1: memref<128x64xf32, #tpu.memory_space<vmem>>, %arg2: memref<64x128xf32, #tpu.memory_space<vmem>>, %arg3: memref<128x64xf32, #tpu.memory_space<vmem>>, %arg4: memref<1x128xf32, #tpu.memory_space<vmem>>, %arg5: memref<128x64xf32, #tpu.memory_space<vmem>>, %arg6: memref<1x1x128xi32, #tpu.memory_space<vmem>>, %arg7: memref<1x1x64xf32, #tpu.memory_space<vmem>>) attributes {dimension_semantics = [#tpu.dimension_semantics<parallel>], iteration_bounds = array<i64: 1>, scalar_prefetch = 0 : i64, scratch_operands = 0 : i64, tpu.core_type = #tpu.core_type<tc>, window_params = [{transform_indices = @transform_0, window_bounds = array<i64: 128, 64>}, {pipeline_mode = #tpu.pipeline_mode<synchronous>, transform_indices = @transform_1, window_bounds = array<i64: 64, 128>}, {pipeline_mode = #tpu.pipeline_mode<synchronous>, transform_indices = @transform_2, window_bounds = array<i64: 128, 64>}, {pipeline_mode = #tpu.pipeline_mode<synchronous>, transform_indices = @transform_3, window_bounds = array<i64: 1, 128>}, {transform_indices = @transform_4, window_bounds = array<i64: 128, 64>}, {transform_indices = @transform_5, window_bounds = array<i64: 1, 1, 128>}, {transform_indices = @transform_6, window_bounds = array<i64: 1, 1, 64>}]} {
    %c0 = arith.constant 0 : index
    %c0_0 = arith.constant 0 : index
    %0 = vector.load %arg1[%c0, %c0_0] : memref<128x64xf32, #tpu.memory_space<vmem>>, vector<128x64xf32>
    %c0_1 = arith.constant 0 : index
    %c0_2 = arith.constant 0 : index
    %1 = vector.load %arg2[%c0_1, %c0_2] : memref<64x128xf32, #tpu.memory_space<vmem>>, vector<64x128xf32>
    %cst = arith.constant dense<0.000000e+00> : vector<128x128xf32>
    %2 = tpu.matmul %0, %1, %cst {dimension_numbers = #tpu.dot_dimension_numbers<[1], [0], [0], [1], [0, 0, 1, 1], [], []>} : vector<128x64xf32>, vector<64x128xf32>, vector<128x128xf32> -> vector<128x128xf32>
    %c0_3 = arith.constant 0 : index
    %c0_4 = arith.constant 0 : index
    %3 = vector.load %arg4[%c0_3, %c0_4] : memref<1x128xf32, #tpu.memory_space<vmem>>, vector<1x128xf32>
    %4 = vector.broadcast %3 : vector<1x128xf32> to vector<128x128xf32>
    %5 = arith.subf %2, %4 : vector<128x128xf32>
    %cst_5 = arith.constant dense<0xFF800000> : vector<128xf32>
    %6 = vector.multi_reduction <maximumf>, %5, %cst_5 [1] : vector<128x128xf32> to vector<128xf32>
    %7 = vector.shape_cast %6 : vector<128xf32> to vector<128x1xf32>
    %8 = tpu.iota {dimensions = array<i32: 1>} : vector<128x128xi32>
    %9 = vector.broadcast %7 : vector<128x1xf32> to vector<128x128xf32>
    %10 = arith.cmpf oeq, %5, %9 : vector<128x128xf32>
    %c128_i32 = arith.constant 128 : i32
    %11 = vector.broadcast %c128_i32 : i32 to vector<128x128xi32>
    %12 = arith.select %10, %8, %11 : vector<128x128xi1>, vector<128x128xi32>
    %cst_6 = arith.constant dense<2147483647> : vector<128xi32>
    %13 = vector.multi_reduction <minsi>, %12, %cst_6 [1] : vector<128x128xi32> to vector<128xi32>
    %14 = vector.shape_cast %13 : vector<128xi32> to vector<128x1xi32>
    %15 = vector.broadcast %14 : vector<128x1xi32> to vector<128x128xi32>
    %16 = arith.cmpi eq, %8, %15 : vector<128x128xi32>
    %17 = arith.extui %16 : vector<128x128xi1> to vector<128x128xi32>
    %18 = arith.sitofp %17 : vector<128x128xi32> to vector<128x128xf32>
    %c0_7 = arith.constant 0 : index
    %c0_8 = arith.constant 0 : index
    %19 = vector.load %arg3[%c0_7, %c0_8] : memref<128x64xf32, #tpu.memory_space<vmem>>, vector<128x64xf32>
    %cst_9 = arith.constant dense<0.000000e+00> : vector<128x64xf32>
    %20 = tpu.matmul %18, %19, %cst_9 {dimension_numbers = #tpu.dot_dimension_numbers<[1], [0], [0], [1], [0, 0, 1, 1], [], []>} : vector<128x128xf32>, vector<128x64xf32>, vector<128x64xf32> -> vector<128x64xf32>
    %c0_10 = arith.constant 0 : index
    %c0_11 = arith.constant 0 : index
    %21 = vector.load %arg5[%c0_10, %c0_11] : memref<128x64xf32, #tpu.memory_space<vmem>>, vector<128x64xf32>
    tpu.vector_store %arg5[%c0_10, %c0_11], %20 {strides = array<i32>} : memref<128x64xf32, #tpu.memory_space<vmem>>, vector<128x64xf32>,
    %22 = vector.shape_cast %13 : vector<128xi32> to vector<1x1x128xi32>
    %c0_12 = arith.constant 0 : index
    %c0_13 = arith.constant 0 : index
    %c0_14 = arith.constant 0 : index
    %23 = vector.load %arg6[%c0_12, %c0_13, %c0_14] : memref<1x1x128xi32, #tpu.memory_space<vmem>>, vector<1x1x128xi32>
    tpu.vector_store %arg6[%c0_12, %c0_13, %c0_14], %22 {strides = array<i32>} : memref<1x1x128xi32, #tpu.memory_space<vmem>>, vector<1x1x128xi32>,
    %24 = arith.subf %20, %0 : vector<128x64xf32>
    %25 = arith.mulf %24, %24 : vector<128x64xf32>
    %cst_15 = arith.constant dense<0.000000e+00> : vector<64xf32>
    %26 = vector.multi_reduction <add>, %25, %cst_15 [0] : vector<128x64xf32> to vector<64xf32>
    %27 = vector.shape_cast %26 : vector<64xf32> to vector<1x64xf32>
    %28 = vector.shape_cast %27 : vector<1x64xf32> to vector<1x1x64xf32>
    %c0_16 = arith.constant 0 : index
    %c0_17 = arith.constant 0 : index
    %c0_18 = arith.constant 0 : index
    %29 = vector.load %arg7[%c0_16, %c0_17, %c0_18] : memref<1x1x64xf32, #tpu.memory_space<vmem>>, vector<1x1x64xf32>
    tpu.vector_store %arg7[%c0_16, %c0_17, %c0_18], %28 {strides = array<i32>} : memref<1x1x64xf32, #tpu.memory_space<vmem>>, vector<1x1x64xf32>,
    return
  }
  func.func @transform_0(%arg0: i32) -> (i32, i32) {
    %c0_i32 = arith.constant 0 : i32
    %c0_i32_0 = arith.constant 0 : i32
    return %arg0, %c0_i32 : i32, i32
  }
  func.func @transform_1(%arg0: i32) -> (i32, i32) {
    %c0_i32 = arith.constant 0 : i32
    %c0_i32_0 = arith.constant 0 : i32
    %c0_i32_1 = arith.constant 0 : i32
    return %c0_i32, %c0_i32_0 : i32, i32
  }
  func.func @transform_2(%arg0: i32) -> (i32, i32) {
    %c0_i32 = arith.constant 0 : i32
    %c0_i32_0 = arith.constant 0 : i32
    %c0_i32_1 = arith.constant 0 : i32
    return %c0_i32, %c0_i32_0 : i32, i32
  }
  func.func @transform_3(%arg0: i32) -> (i32, i32) {
    %c0_i32 = arith.constant 0 : i32
    %c0_i32_0 = arith.constant 0 : i32
    %c0_i32_1 = arith.constant 0 : i32
    return %c0_i32, %c0_i32_0 : i32, i32
  }
  func.func @transform_4(%arg0: i32) -> (i32, i32) {
    %c0_i32 = arith.constant 0 : i32
    %c0_i32_0 = arith.constant 0 : i32
    return %arg0, %c0_i32 : i32, i32
  }
  func.func @transform_5(%arg0: i32) -> (i32, i32, i32) {
    %c0_i32 = arith.constant 0 : i32
    %c0_i32_0 = arith.constant 0 : i32
    %c0_i32_1 = arith.constant 0 : i32
    return %arg0, %c0_i32, %c0_i32_0 : i32, i32, i32
  }
  func.func @transform_6(%arg0: i32) -> (i32, i32, i32) {
    %c0_i32 = arith.constant 0 : i32
    %c0_i32_0 = arith.constant 0 : i32
    %c0_i32_1 = arith.constant 0 : i32
    return %arg0, %c0_i32, %c0_i32_0 : i32, i32, i32
  }
}

</mosaic_0001>

<llo_original>
// kernel: tpu_custom_call.1
$region0: #{tpu_custom_call.1}
  #allocation0 [shape = 'u32[]', space=smem, size = 0x4, offset = 0x4, fixed_abs, tag = 'smem constant byte address 0x4 - core index']
  #allocation1 [shape = 'u32[144,128]{1,0:T(1,128)}', space=vmem, size = 0x12000, scoped, tag = 'internal scratch']
  %s0 = inlined_call_operand.vmem [shape: f32[128,64], index: 0, kind: input, shape index: {}]
  %s1 = inlined_call_operand.vmem [shape: f32[64,128], index: 1, kind: input, shape index: {}]
  %s2 = inlined_call_operand.vmem [shape: f32[128,64], index: 2, kind: input, shape index: {}]
  %s3 = inlined_call_operand.vmem [shape: f32[1,128], index: 3, kind: input, shape index: {}]
  %s4 = inlined_call_operand.vmem [shape: f32[128,64], index: 4, kind: output, shape index: {0}]
  %s5 = inlined_call_operand.hbm [shape: s32[1,1,128], index: 5, kind: output, shape index: {1}]
  %s6 = inlined_call_operand.hbm [shape: f32[1,1,64], index: 6, kind: output, shape index: {2}]
  %7 = xla_tuple %s4, %s5, %s6
  %s8 = sld [smem:[#allocation0]]
  $region42: #{tpu_custom_call.1} parent=0
    _
  %s10 = ssub.s32 1, %s8
  %s11 = scalar_select 0, %s10, %s8
  $region1: #{tpu_custom_call.1} parent=0
    #allocation2 [shape = 'u8[512]{0}', space=vmem, size = 0x400, scoped, tag = 'output window, operand 1, single buffered']
    #allocation3 [shape = 's32[1]{0}', space=sflag, size = 0x4, scoped, tag = 'scoped memory for tpu_custom_call.1']
    #allocation4 [shape = 'u8[512]{0}', space=vmem, size = 0x400, scoped, tag = 'output window, operand 2, single buffered']
    #allocation5 [shape = 's32[1]{0}', space=sflag, size = 0x4, scoped, tag = 'scoped memory for tpu_custom_call.1']
    %12 = vsyncpa [#allocation3], 0
    %13 = vsyncpa [#allocation5], 0
    // Predicated region
    $region2: #{tpu_custom_call.1} parent=1 // pred_check
      _
    $region3: #{tpu_custom_call.1} parent=1 // pred_check_branch
      %15 = sbr.rel (0) target = $region5
    $region4: #{tpu_custom_call.1} parent=1 // pred_region
      _
    $region5: #{tpu_custom_call.1} parent=1 // pred_fallthru
      _
    // Predicated region
    $region6: #{tpu_custom_call.1} parent=1 // pred_check
      _
    $region7: #{tpu_custom_call.1} parent=1 // pred_check_branch
      %17 = sbr.rel (0) target = $region9
    $region8: #{tpu_custom_call.1} parent=1 // pred_region
      _
    $region9: #{tpu_custom_call.1} parent=1 // pred_fallthru
      _
    // Predicated region
    $region10: #{tpu_custom_call.1} parent=1 // pred_check
      _
    $region11: #{tpu_custom_call.1} parent=1 // pred_check_branch
      %19 = sbr.rel (0) target = $region13
    $region12: #{tpu_custom_call.1} parent=1 // pred_region
      _
    $region13: #{tpu_custom_call.1} parent=1 // pred_fallthru
      _
    // Predicated region
    $region14: #{tpu_custom_call.1} parent=1 // pred_check
      _
    $region15: #{tpu_custom_call.1} parent=1 // pred_check_branch
      %21 = sbr.rel (0) target = $region17
    $region16: #{tpu_custom_call.1} parent=1 // pred_region
      _
    $region17: #{tpu_custom_call.1} parent=1 // pred_fallthru
      _
    %v22 = vld [vmem:[%s0] sm:$0xff]
    %v23 = vld [vmem:[%s0 + $0x8] sm:$0xff]
    %v24 = vld [vmem:[%s0 + $0x10] sm:$0xff]
    %v25 = vld [vmem:[%s0 + $0x18] sm:$0xff]
    %v26 = vld [vmem:[%s0 + $0x20] sm:$0xff]
    %v27 = vld [vmem:[%s0 + $0x28] sm:$0xff]
    %v28 = vld [vmem:[%s0 + $0x30] sm:$0xff]
    %v29 = vld [vmem:[%s0 + $0x38] sm:$0xff]
    %v30 = vld [vmem:[%s0 + $0x40] sm:$0xff]
    %v31 = vld [vmem:[%s0 + $0x48] sm:$0xff]
    %v32 = vld [vmem:[%s0 + $0x50] sm:$0xff]
    %v33 = vld [vmem:[%s0 + $0x58] sm:$0xff]
    %v34 = vld [vmem:[%s0 + $0x60] sm:$0xff]
    %v35 = vld [vmem:[%s0 + $0x68] sm:$0xff]
    %v36 = vld [vmem:[%s0 + $0x70] sm:$0xff]
    %v37 = vld [vmem:[%s0 + $0x78] sm:$0xff]
    %v38 = vld [vmem:[%s1] sm:$0xff]
    %v39 = vld [vmem:[%s1 + $0x8] sm:$0xff]
    %v40 = vld [vmem:[%s1 + $0x10] sm:$0xff]
    %v41 = vld [vmem:[%s1 + $0x18] sm:$0xff]
    %v42 = vld [vmem:[%s1 + $0x20] sm:$0xff]
    %v43 = vld [vmem:[%s1 + $0x28] sm:$0xff]
    %v44 = vld [vmem:[%s1 + $0x30] sm:$0xff]
    %v45 = vld [vmem:[%s1 + $0x38] sm:$0xff]
    %vm46 = vcmask 523264
    %v48 = vsel %vm46, %v22, 0
    %v51 = vsel %vm46, %v23, 0
    %v54 = vsel %vm46, %v24, 0
    %v57 = vsel %vm46, %v25, 0
    %v60 = vsel %vm46, %v26, 0
    %v63 = vsel %vm46, %v27, 0
    %v66 = vsel %vm46, %v28, 0
    %v69 = vsel %vm46, %v29, 0
    %v72 = vsel %vm46, %v30, 0
    %v75 = vsel %vm46, %v31, 0
    %v78 = vsel %vm46, %v32, 0
    %v81 = vsel %vm46, %v33, 0
    %v84 = vsel %vm46, %v34, 0
    %v87 = vsel %vm46, %v35, 0
    %v90 = vsel %vm46, %v36, 0
    %v93 = vsel %vm46, %v37, 0
    %95 = vmatprep.subr.mxu0 0.0
    %96 = vmatpush1.msra.mxu0 %v38
    %97 = vmatprep.subr.mxu0 0.0
    %98 = vmatpush1.msra.mxu0 %v39
    %99 = vmatprep.subr.mxu0 0.0
    %100 = vmatpush1.msra.mxu0 %v40
    %101 = vmatprep.subr.mxu0 0.0
    %102 = vmatpush1.msra.mxu0 %v41
    %103 = vmatprep.subr.mxu0 0.0
    %104 = vmatpush1.msra.mxu0 %v42
    %105 = vmatprep.subr.mxu0 0.0
    %106 = vmatpush1.msra.mxu0 %v43
    %107 = vmatprep.subr.mxu0 0.0
    %108 = vmatpush1.msra.mxu0 %v44
    %109 = vmatprep.subr.mxu0 0.0
    %110 = vmatpush1.msra.mxu0 %v45
    %111 = vmatprep.subr.mxu0 0.0
    %112 = vmatpush1.msra.mxu0 0.0
    %113 = vmatprep.subr.mxu0 0.0
    %114 = vmatpush1.msra.mxu0 0.0
    %115 = vmatprep.subr.mxu0 0.0
    %116 = vmatpush1.msra.mxu0 0.0
    %117 = vmatprep.subr.mxu0 0.0
    %118 = vmatpush1.msra.mxu0 0.0
    %119 = vmatprep.subr.mxu0 0.0
    %120 = vmatpush1.msra.mxu0 0.0
    %121 = vmatprep.subr.mxu0 0.0
    %122 = vmatpush1.msra.mxu0 0.0
    %123 = vmatprep.subr.mxu0 0.0
    %124 = vmatpush1.msra.mxu0 0.0
    %125 = vmatprep.subr.mxu0 0.0
    %126 = vmatpush1.msra.mxu0 0.0
    %127 = vmatprep.subr.mxu0 0.0
    %128 = vmatpush1.msra.mxu0 0.0
    %129 = vmatprep.subr.mxu0 0.0
    %130 = vmatpush1.msra.mxu0 0.0
    %131 = vmatprep.subr.mxu0 0.0
    %132 = vmatpush1.msra.mxu0 0.0
    %133 = vmatprep.subr.mxu0 0.0
    %134 = vmatpush1.msra.mxu0 0.0
    %135 = vmatprep.subr.mxu0 0.0
    %136 = vmatpush1.msra.mxu0 0.0
    %137 = vmatprep.subr.mxu0 0.0
    %138 = vmatpush1.msra.mxu0 0.0
    %139 = vmatprep.subr.mxu0 0.0
    %140 = vmatpush1.msra.mxu0 0.0
    %141 = vmatprep.subr.mxu0 0.0
    %142 = vmatpush1.msra.mxu0 0.0
    %143 = vmatprep.subr.mxu0 0.0
    %144 = vmatpush1.msra.mxu0 0.0
    %145 = vmatprep.subr.mxu0 0.0
    %146 = vmatpush1.msra.mxu0 0.0
    %147 = vmatprep.subr.mxu0 0.0
    %148 = vmatpush1.msra.mxu0 0.0
    %149 = vmatprep.subr.mxu0 0.0
    %150 = vmatpush1.msra.mxu0 0.0
    %151 = vmatprep.subr.mxu0 0.0
    %152 = vmatpush1.msra.mxu0 0.0
    %153 = vmatprep.subr.mxu0 0.0
    %154 = vmatpush1.msra.mxu0 0.0
    %155 = vmatprep.subr.mxu0 0.0
    %156 = vmatpush1.msra.mxu0 0.0
    %157 = vmatprep.subr.mxu0 0.0
    %158 = vmatpush1.msra.mxu0 0.0
    %159 = vmatprep.mubr.f32.mxu0 0.0
    %160 = vmatmul.mubr.f32.gmra.mrb[0].mxu0 %v48
    %v161 = vpop.f32.mrb[0].mxu0
    %v162 = vadd.f32 0.0, %v161
    %v163 = vpop.f32.mrb[0].mxu0
    %164 = vmatprep.mubr.f32.mxu0 0.0
    %165 = vmatmul.mubr.f32.gmra.mrb[0].mxu0 %v51
    %v166 = vpop.f32.mrb[0].mxu0
    %v167 = vadd.f32 0.0, %v166
    %v168 = vpop.f32.mrb[0].mxu0
    %169 = vmatprep.mubr.f32.mxu0 0.0
    %170 = vmatmul.mubr.f32.gmra.mrb[0].mxu0 %v54
    %v171 = vpop.f32.mrb[0].mxu0
    %v172 = vadd.f32 0.0, %v171
    %v173 = vpop.f32.mrb[0].mxu0
    %174 = vmatprep.mubr.f32.mxu0 0.0
    %175 = vmatmul.mubr.f32.gmra.mrb[0].mxu0 %v57
    %v176 = vpop.f32.mrb[0].mxu0
    %v177 = vadd.f32 0.0, %v176
    %v178 = vpop.f32.mrb[0].mxu0
    %179 = vmatprep.mubr.f32.mxu0 0.0
    %180 = vmatmul.mubr.f32.gmra.mrb[0].mxu0 %v60
    %v181 = vpop.f32.mrb[0].mxu0
    %v182 = vadd.f32 0.0, %v181
    %v183 = vpop.f32.mrb[0].mxu0
    %184 = vmatprep.mubr.f32.mxu0 0.0
    %185 = vmatmul.mubr.f32.gmra.mrb[0].mxu0 %v63
    %v186 = vpop.f32.mrb[0].mxu0
    %v187 = vadd.f32 0.0, %v186
    %v188 = vpop.f32.mrb[0].mxu0
    %189 = vmatprep.mubr.f32.mxu0 0.0
    %190 = vmatmul.mubr.f32.gmra.mrb[0].mxu0 %v66
    %v191 = vpop.f32.mrb[0].mxu0
    %v192 = vadd.f32 0.0, %v191
    %v193 = vpop.f32.mrb[0].mxu0
    %194 = vmatprep.mubr.f32.mxu0 0.0
    %195 = vmatmul.mubr.f32.gmra.mrb[0].mxu0 %v69
    %v196 = vpop.f32.mrb[0].mxu0
    %v197 = vadd.f32 0.0, %v196
    %v198 = vpop.f32.mrb[0].mxu0
    %199 = vmatprep.mubr.f32.mxu0 0.0
    %200 = vmatmul.mubr.f32.gmra.mrb[0].mxu0 %v72
    %v201 = vpop.f32.mrb[0].mxu0
    %v202 = vadd.f32 0.0, %v201
    %v203 = vpop.f32.mrb[0].mxu0
    %204 = vmatprep.mubr.f32.mxu0 0.0
    %205 = vmatmul.mubr.f32.gmra.mrb[0].mxu0 %v75
    %v206 = vpop.f32.mrb[0].mxu0
    %v207 = vadd.f32 0.0, %v206
    %v208 = vpop.f32.mrb[0].mxu0
    %209 = vmatprep.mubr.f32.mxu0 0.0
    %210 = vmatmul.mubr.f32.gmra.mrb[0].mxu0 %v78
    %v211 = vpop.f32.mrb[0].mxu0
    %v212 = vadd.f32 0.0, %v211
    %v213 = vpop.f32.mrb[0].mxu0
    %214 = vmatprep.mubr.f32.mxu0 0.0
    %215 = vmatmul.mubr.f32.gmra.mrb[0].mxu0 %v81
    %v216 = vpop.f32.mrb[0].mxu0
    %v217 = vadd.f32 0.0, %v216
    %v218 = vpop.f32.mrb[0].mxu0
    %219 = vmatprep.mubr.f32.mxu0 0.0
    %220 = vmatmul.mubr.f32.gmra.mrb[0].mxu0 %v84
    %v221 = vpop.f32.mrb[0].mxu0
    %v222 = vadd.f32 0.0, %v221
    %v223 = vpop.f32.mrb[0].mxu0
    %224 = vmatprep.mubr.f32.mxu0 0.0
    %225 = vmatmul.mubr.f32.gmra.mrb[0].mxu0 %v87
    %v226 = vpop.f32.mrb[0].mxu0
    %v227 = vadd.f32 0.0, %v226
    %v228 = vpop.f32.mrb[0].mxu0
    %229 = vmatprep.mubr.f32.mxu0 0.0
    %230 = vmatmul.mubr.f32.gmra.mrb[0].mxu0 %v90
    %v231 = vpop.f32.mrb[0].mxu0
    %v232 = vadd.f32 0.0, %v231
    %v233 = vpop.f32.mrb[0].mxu0
    %234 = vmatprep.mubr.f32.mxu0 0.0
    %235 = vmatmul.mubr.f32.gmra.mrb[0].mxu0 %v93
    %v236 = vpop.f32.mrb[0].mxu0
    %v237 = vadd.f32 0.0, %v236
    %v238 = vpop.f32.mrb[0].mxu0
    %239 = vdwg.mxu0
    %v240 = vld [vmem:[%s3] sm:$0x1]
    %v242 = vlaneseq
    %v243 = vshrl.u32 %v242, 7
    %v244 = vsub.s32 0, %v243
    %v245 = vrot.slane %v240, %v244
    %v247 = vsub.f32 %v162, %v245
    %v248 = vsub.f32 %v167, %v245
    %v249 = vsub.f32 %v172, %v245
    %v250 = vsub.f32 %v177, %v245
    %v251 = vsub.f32 %v182, %v245
    %v252 = vsub.f32 %v187, %v245
    %v253 = vsub.f32 %v192, %v245
    %v254 = vsub.f32 %v197, %v245
    %v255 = vsub.f32 %v202, %v245
    %v256 = vsub.f32 %v207, %v245
    %v257 = vsub.f32 %v212, %v245
    %v258 = vsub.f32 %v217, %v245
    %v259 = vsub.f32 %v222, %v245
    %v260 = vsub.f32 %v227, %v245
    %v261 = vsub.f32 %v232, %v245
    %v262 = vsub.f32 %v237, %v245
    %263 = vmax.xlane.f32.xlu0 %v247
    %v264 = vpop.xlane.xlu0 %263
    %265 = vmax.xlane.f32.xlu0 %v248
    %v266 = vpop.xlane.xlu0 %265
    %267 = vmax.xlane.f32.xlu0 %v249
    %v268 = vpop.xlane.xlu0 %267
    %269 = vmax.xlane.f32.xlu0 %v250
    %v270 = vpop.xlane.xlu0 %269
    %271 = vmax.xlane.f32.xlu0 %v251
    %v272 = vpop.xlane.xlu0 %271
    %273 = vmax.xlane.f32.xlu0 %v252
    %v274 = vpop.xlane.xlu0 %273
    %275 = vmax.xlane.f32.xlu0 %v253
    %v276 = vpop.xlane.xlu0 %275
    %277 = vmax.xlane.f32.xlu0 %v254
    %v278 = vpop.xlane.xlu0 %277
    %279 = vmax.xlane.f32.xlu0 %v255
    %v280 = vpop.xlane.xlu0 %279
    %281 = vmax.xlane.f32.xlu0 %v256
    %v282 = vpop.xlane.xlu0 %281
    %283 = vmax.xlane.f32.xlu0 %v257
    %v284 = vpop.xlane.xlu0 %283
    %285 = vmax.xlane.f32.xlu0 %v258
    %v286 = vpop.xlane.xlu0 %285
    %287 = vmax.xlane.f32.xlu0 %v259
    %v288 = vpop.xlane.xlu0 %287
    %289 = vmax.xlane.f32.xlu0 %v260
    %v290 = vpop.xlane.xlu0 %289
    %291 = vmax.xlane.f32.xlu0 %v261
    %v292 = vpop.xlane.xlu0 %291
    %293 = vmax.xlane.f32.xlu0 %v262
    %v294 = vpop.xlane.xlu0 %293
    %v295 = vlaneseq
    %v296 = vand.u32 %v295, 127
    %vm297 = vcmp.eq.f32.partialorder %v247, %v264
    %vm298 = vcmp.eq.f32.partialorder %v248, %v266
    %vm299 = vcmp.eq.f32.partialorder %v249, %v268
    %vm300 = vcmp.eq.f32.partialorder %v250, %v270
    %vm301 = vcmp.eq.f32.partialorder %v251, %v272
    %vm302 = vcmp.eq.f32.partialorder %v252, %v274
    %vm303 = vcmp.eq.f32.partialorder %v253, %v276
    %vm304 = vcmp.eq.f32.partialorder %v254, %v278
    %vm305 = vcmp.eq.f32.partialorder %v255, %v280
    %vm306 = vcmp.eq.f32.partialorder %v256, %v282
    %vm307 = vcmp.eq.f32.partialorder %v257, %v284
    %vm308 = vcmp.eq.f32.partialorder %v258, %v286
    %vm309 = vcmp.eq.f32.partialorder %v259, %v288
    %vm310 = vcmp.eq.f32.partialorder %v260, %v290
    %vm311 = vcmp.eq.f32.partialorder %v261, %v292
    %vm312 = vcmp.eq.f32.partialorder %v262, %v294
    %v313 = vsel %vm297, %v296, 128
    %v314 = vsel %vm298, %v296, 128
    %v315 = vsel %vm299, %v296, 128
    %v316 = vsel %vm300, %v296, 128
    %v317 = vsel %vm301, %v296, 128
    %v318 = vsel %vm302, %v296, 128
    %v319 = vsel %vm303, %v296, 128
    %v320 = vsel %vm304, %v296, 128
    %v321 = vsel %vm305, %v296, 128
    %v322 = vsel %vm306, %v296, 128
    %v323 = vsel %vm307, %v296, 128
    %v324 = vsel %vm308, %v296, 128
    %v325 = vsel %vm309, %v296, 128
    %v326 = vsel %vm310, %v296, 128
    %v327 = vsel %vm311, %v296, 128
    %v328 = vsel %vm312, %v296, 128
    %v329 = vand.u32 %v313, 65535
    %v330 = vshra.s32 %v313, 16
    %v331 = vcvt.s32.f32 %v329
    %v332 = vcvt.s32.f32 %v330
    %333 = vmin.xlane.f32.xlu0 %v332
    %v334 = vpop.xlane.xlu0 %333
    %vm335 = vcmp.eq.f32.partialorder %v332, %v334
    %v336 = vsel %vm335, %v331, inf
    %337 = vmin.xlane.f32.xlu0 %v336
    %v338 = vpop.xlane.xlu0 %337
    %v339 = vcvt.f32.s32 %v338
    %v340 = vcvt.f32.s32 %v334
    %v341 = vshll.u32 %v340, 16
    %v342 = vadd.s32 %v341, %v339
    %v343 = vand.u32 %v314, 65535
    %v344 = vshra.s32 %v314, 16
    %v345 = vcvt.s32.f32 %v343
    %v346 = vcvt.s32.f32 %v344
    %347 = vmin.xlane.f32.xlu0 %v346
    %v348 = vpop.xlane.xlu0 %347
    %vm349 = vcmp.eq.f32.partialorder %v346, %v348
    %v350 = vsel %vm349, %v345, inf
    %351 = vmin.xlane.f32.xlu0 %v350
    %v352 = vpop.xlane.xlu0 %351
    %v353 = vcvt.f32.s32 %v352
    %v354 = vcvt.f32.s32 %v348
    %v355 = vshll.u32 %v354, 16
    %v356 = vadd.s32 %v355, %v353
    %v357 = vand.u32 %v315, 65535
    %v358 = vshra.s32 %v315, 16
    %v359 = vcvt.s32.f32 %v357
    %v360 = vcvt.s32.f32 %v358
    %361 = vmin.xlane.f32.xlu0 %v360
    %v362 = vpop.xlane.xlu0 %361
    %vm363 = vcmp.eq.f32.partialorder %v360, %v362
    %v364 = vsel %vm363, %v359, inf
    %365 = vmin.xlane.f32.xlu0 %v364
    %v366 = vpop.xlane.xlu0 %365
    %v367 = vcvt.f32.s32 %v366
    %v368 = vcvt.f32.s32 %v362
    %v369 = vshll.u32 %v368, 16
    %v370 = vadd.s32 %v369, %v367
    %v371 = vand.u32 %v316, 65535
    %v372 = vshra.s32 %v316, 16
    %v373 = vcvt.s32.f32 %v371
    %v374 = vcvt.s32.f32 %v372
    %375 = vmin.xlane.f32.xlu0 %v374
    %v376 = vpop.xlane.xlu0 %375
    %vm377 = vcmp.eq.f32.partialorder %v374, %v376
    %v378 = vsel %vm377, %v373, inf
    %379 = vmin.xlane.f32.xlu0 %v378
    %v380 = vpop.xlane.xlu0 %379
    %v381 = vcvt.f32.s32 %v380
    %v382 = vcvt.f32.s32 %v376
    %v383 = vshll.u32 %v382, 16
    %v384 = vadd.s32 %v383, %v381
    %v385 = vand.u32 %v317, 65535
    %v386 = vshra.s32 %v317, 16
    %v387 = vcvt.s32.f32 %v385
    %v388 = vcvt.s32.f32 %v386
    %389 = vmin.xlane.f32.xlu0 %v388
    %v390 = vpop.xlane.xlu0 %389
    %vm391 = vcmp.eq.f32.partialorder %v388, %v390
    %v392 = vsel %vm391, %v387, inf
    %393 = vmin.xlane.f32.xlu0 %v392
    %v394 = vpop.xlane.xlu0 %393
    %v395 = vcvt.f32.s32 %v394
    %v396 = vcvt.f32.s32 %v390
    %v397 = vshll.u32 %v396, 16
    %v398 = vadd.s32 %v397, %v395
    %v399 = vand.u32 %v318, 65535
    %v400 = vshra.s32 %v318, 16
    %v401 = vcvt.s32.f32 %v399
    %v402 = vcvt.s32.f32 %v400
    %403 = vmin.xlane.f32.xlu0 %v402
    %v404 = vpop.xlane.xlu0 %403
    %vm405 = vcmp.eq.f32.partialorder %v402, %v404
    %v406 = vsel %vm405, %v401, inf
    %407 = vmin.xlane.f32.xlu0 %v406
    %v408 = vpop.xlane.xlu0 %407
    %v409 = vcvt.f32.s32 %v408
    %v410 = vcvt.f32.s32 %v404
    %v411 = vshll.u32 %v410, 16
    %v412 = vadd.s32 %v411, %v409
    %v413 = vand.u32 %v319, 65535
    %v414 = vshra.s32 %v319, 16
    %v415 = vcvt.s32.f32 %v413
    %v416 = vcvt.s32.f32 %v414
    %417 = vmin.xlane.f32.xlu0 %v416
    %v418 = vpop.xlane.xlu0 %417
    %vm419 = vcmp.eq.f32.partialorder %v416, %v418
    %v420 = vsel %vm419, %v415, inf
    %421 = vmin.xlane.f32.xlu0 %v420
    %v422 = vpop.xlane.xlu0 %421
    %v423 = vcvt.f32.s32 %v422
    %v424 = vcvt.f32.s32 %v418
    %v425 = vshll.u32 %v424, 16
    %v426 = vadd.s32 %v425, %v423
    %v427 = vand.u32 %v320, 65535
    %v428 = vshra.s32 %v320, 16
    %v429 = vcvt.s32.f32 %v427
    %v430 = vcvt.s32.f32 %v428
    %431 = vmin.xlane.f32.xlu0 %v430
    %v432 = vpop.xlane.xlu0 %431
    %vm433 = vcmp.eq.f32.partialorder %v430, %v432
    %v434 = vsel %vm433, %v429, inf
    %435 = vmin.xlane.f32.xlu0 %v434
    %v436 = vpop.xlane.xlu0 %435
    %v437 = vcvt.f32.s32 %v436
    %v438 = vcvt.f32.s32 %v432
    %v439 = vshll.u32 %v438, 16
    %v440 = vadd.s32 %v439, %v437
    %v441 = vand.u32 %v321, 65535
    %v442 = vshra.s32 %v321, 16
    %v443 = vcvt.s32.f32 %v441
    %v444 = vcvt.s32.f32 %v442
    %445 = vmin.xlane.f32.xlu0 %v444
    %v446 = vpop.xlane.xlu0 %445
    %vm447 = vcmp.eq.f32.partialorder %v444, %v446
    %v448 = vsel %vm447, %v443, inf
    %449 = vmin.xlane.f32.xlu0 %v448
    %v450 = vpop.xlane.xlu0 %449
    %v451 = vcvt.f32.s32 %v450
    %v452 = vcvt.f32.s32 %v446
    %v453 = vshll.u32 %v452, 16
    %v454 = vadd.s32 %v453, %v451
    %v455 = vand.u32 %v322, 65535
    %v456 = vshra.s32 %v322, 16
    %v457 = vcvt.s32.f32 %v455
    %v458 = vcvt.s32.f32 %v456
    %459 = vmin.xlane.f32.xlu0 %v458
    %v460 = vpop.xlane.xlu0 %459
    %vm461 = vcmp.eq.f32.partialorder %v458, %v460
    %v462 = vsel %vm461, %v457, inf
    %463 = vmin.xlane.f32.xlu0 %v462
    %v464 = vpop.xlane.xlu0 %463
    %v465 = vcvt.f32.s32 %v464
    %v466 = vcvt.f32.s32 %v460
    %v467 = vshll.u32 %v466, 16
    %v468 = vadd.s32 %v467, %v465
    %v469 = vand.u32 %v323, 65535
    %v470 = vshra.s32 %v323, 16
    %v471 = vcvt.s32.f32 %v469
    %v472 = vcvt.s32.f32 %v470
    %473 = vmin.xlane.f32.xlu0 %v472
    %v474 = vpop.xlane.xlu0 %473
    %vm475 = vcmp.eq.f32.partialorder %v472, %v474
    %v476 = vsel %vm475, %v471, inf
    %477 = vmin.xlane.f32.xlu0 %v476
    %v478 = vpop.xlane.xlu0 %477
    %v479 = vcvt.f32.s32 %v478
    %v480 = vcvt.f32.s32 %v474
    %v481 = vshll.u32 %v480, 16
    %v482 = vadd.s32 %v481, %v479
    %v483 = vand.u32 %v324, 65535
    %v484 = vshra.s32 %v324, 16
    %v485 = vcvt.s32.f32 %v483
    %v486 = vcvt.s32.f32 %v484
    %487 = vmin.xlane.f32.xlu0 %v486
    %v488 = vpop.xlane.xlu0 %487
    %vm489 = vcmp.eq.f32.partialorder %v486, %v488
    %v490 = vsel %vm489, %v485, inf
    %491 = vmin.xlane.f32.xlu0 %v490
    %v492 = vpop.xlane.xlu0 %491
    %v493 = vcvt.f32.s32 %v492
    %v494 = vcvt.f32.s32 %v488
    %v495 = vshll.u32 %v494, 16
    %v496 = vadd.s32 %v495, %v493
    %v497 = vand.u32 %v325, 65535
    %v498 = vshra.s32 %v325, 16
    %v499 = vcvt.s32.f32 %v497
    %v500 = vcvt.s32.f32 %v498
    %501 = vmin.xlane.f32.xlu0 %v500
    %v502 = vpop.xlane.xlu0 %501
    %vm503 = vcmp.eq.f32.partialorder %v500, %v502
    %v504 = vsel %vm503, %v499, inf
    %505 = vmin.xlane.f32.xlu0 %v504
    %v506 = vpop.xlane.xlu0 %505
    %v507 = vcvt.f32.s32 %v506
    %v508 = vcvt.f32.s32 %v502
    %v509 = vshll.u32 %v508, 16
    %v510 = vadd.s32 %v509, %v507
    %v511 = vand.u32 %v326, 65535
    %v512 = vshra.s32 %v326, 16
    %v513 = vcvt.s32.f32 %v511
    %v514 = vcvt.s32.f32 %v512
    %515 = vmin.xlane.f32.xlu0 %v514
    %v516 = vpop.xlane.xlu0 %515
    %vm517 = vcmp.eq.f32.partialorder %v514, %v516
    %v518 = vsel %vm517, %v513, inf
    %519 = vmin.xlane.f32.xlu0 %v518
    %v520 = vpop.xlane.xlu0 %519
    %v521 = vcvt.f32.s32 %v520
    %v522 = vcvt.f32.s32 %v516
    %v523 = vshll.u32 %v522, 16
    %v524 = vadd.s32 %v523, %v521
    %v525 = vand.u32 %v327, 65535
    %v526 = vshra.s32 %v327, 16
    %v527 = vcvt.s32.f32 %v525
    %v528 = vcvt.s32.f32 %v526
    %529 = vmin.xlane.f32.xlu0 %v528
    %v530 = vpop.xlane.xlu0 %529
    %vm531 = vcmp.eq.f32.partialorder %v528, %v530
    %v532 = vsel %vm531, %v527, inf
    %533 = vmin.xlane.f32.xlu0 %v532
    %v534 = vpop.xlane.xlu0 %533
    %v535 = vcvt.f32.s32 %v534
    %v536 = vcvt.f32.s32 %v530
    %v537 = vshll.u32 %v536, 16
    %v538 = vadd.s32 %v537, %v535
    %v539 = vand.u32 %v328, 65535
    %v540 = vshra.s32 %v328, 16
    %v541 = vcvt.s32.f32 %v539
    %v542 = vcvt.s32.f32 %v540
    %543 = vmin.xlane.f32.xlu0 %v542
    %v544 = vpop.xlane.xlu0 %543
    %vm545 = vcmp.eq.f32.partialorder %v542, %v544
    %v546 = vsel %vm545, %v541, inf
    %547 = vmin.xlane.f32.xlu0 %v546
    %v548 = vpop.xlane.xlu0 %547
    %v549 = vcvt.f32.s32 %v548
    %v550 = vcvt.f32.s32 %v544
    %v551 = vshll.u32 %v550, 16
    %v552 = vadd.s32 %v551, %v549
    %vm553 = vcmp.eq.s32.totalorder %v296, %v342
    %vm554 = vcmp.eq.s32.totalorder %v296, %v356
    %vm555 = vcmp.eq.s32.totalorder %v296, %v370
    %vm556 = vcmp.eq.s32.totalorder %v296, %v384
    %vm557 = vcmp.eq.s32.totalorder %v296, %v398
    %vm558 = vcmp.eq.s32.totalorder %v296, %v412
    %vm559 = vcmp.eq.s32.totalorder %v296, %v426
    %vm560 = vcmp.eq.s32.totalorder %v296, %v440
    %vm561 = vcmp.eq.s32.totalorder %v296, %v454
    %vm562 = vcmp.eq.s32.totalorder %v296, %v468
    %vm563 = vcmp.eq.s32.totalorder %v296, %v482
    %vm564 = vcmp.eq.s32.totalorder %v296, %v496
    %vm565 = vcmp.eq.s32.totalorder %v296, %v510
    %vm566 = vcmp.eq.s32.totalorder %v296, %v524
    %vm567 = vcmp.eq.s32.totalorder %v296, %v538
    %vm568 = vcmp.eq.s32.totalorder %v296, %v552
    %v569 = vsel %vm553, 1, 0
    %v570 = vsel %vm554, 1, 0
    %v571 = vsel %vm555, 1, 0
    %v572 = vsel %vm556, 1, 0
    %v573 = vsel %vm557, 1, 0
    %v574 = vsel %vm558, 1, 0
    %v575 = vsel %vm559, 1, 0
    %v576 = vsel %vm560, 1, 0
    %v577 = vsel %vm561, 1, 0
    %v578 = vsel %vm562, 1, 0
    %v579 = vsel %vm563, 1, 0
    %v580 = vsel %vm564, 1, 0
    %v581 = vsel %vm565, 1, 0
    %v582 = vsel %vm566, 1, 0
    %v583 = vsel %vm567, 1, 0
    %v584 = vsel %vm568, 1, 0
    %v585 = vcvt.s32.f32 %v569
    %v586 = vcvt.s32.f32 %v570
    %v587 = vcvt.s32.f32 %v571
    %v588 = vcvt.s32.f32 %v572
    %v589 = vcvt.s32.f32 %v573
    %v590 = vcvt.s32.f32 %v574
    %v591 = vcvt.s32.f32 %v575
    %v592 = vcvt.s32.f32 %v576
    %v593 = vcvt.s32.f32 %v577
    %v594 = vcvt.s32.f32 %v578
    %v595 = vcvt.s32.f32 %v579
    %v596 = vcvt.s32.f32 %v580
    %v597 = vcvt.s32.f32 %v581
    %v598 = vcvt.s32.f32 %v582
    %v599 = vcvt.s32.f32 %v583
    %v600 = vcvt.s32.f32 %v584
    %v601 = vld [vmem:[%s2] sm:$0xff]
    %v602 = vld [vmem:[%s2 + $0x8] sm:$0xff]
    %v603 = vld [vmem:[%s2 + $0x10] sm:$0xff]
    %v604 = vld [vmem:[%s2 + $0x18] sm:$0xff]
    %v605 = vld [vmem:[%s2 + $0x20] sm:$0xff]
    %v606 = vld [vmem:[%s2 + $0x28] sm:$0xff]
    %v607 = vld [vmem:[%s2 + $0x30] sm:$0xff]
    %v608 = vld [vmem:[%s2 + $0x38] sm:$0xff]
    %v609 = vld [vmem:[%s2 + $0x40] sm:$0xff]
    %v610 = vld [vmem:[%s2 + $0x48] sm:$0xff]
    %v611 = vld [vmem:[%s2 + $0x50] sm:$0xff]
    %v612 = vld [vmem:[%s2 + $0x58] sm:$0xff]
    %v613 = vld [vmem:[%s2 + $0x60] sm:$0xff]
    %v614 = vld [vmem:[%s2 + $0x68] sm:$0xff]
    %v615 = vld [vmem:[%s2 + $0x70] sm:$0xff]
    %v616 = vld [vmem:[%s2 + $0x78] sm:$0xff]
    %617 = vmatprep.subr.mxu0 0.0
    %618 = vmatpush1.msra.mxu0 %v601
    %619 = vmatprep.subr.mxu0 0.0
    %620 = vmatpush1.msra.mxu0 %v602
    %621 = vmatprep.subr.mxu0 0.0
    %622 = vmatpush1.msra.mxu0 %v603
    %623 = vmatprep.subr.mxu0 0.0
    %624 = vmatpush1.msra.mxu0 %v604
    %625 = vmatprep.subr.mxu0 0.0
    %626 = vmatpush1.msra.mxu0 %v605
    %627 = vmatprep.subr.mxu0 0.0
    %628 = vmatpush1.msra.mxu0 %v606
    %629 = vmatprep.subr.mxu0 0.0
    %630 = vmatpush1.msra.mxu0 %v607
    %631 = vmatprep.subr.mxu0 0.0
    %632 = vmatpush1.msra.mxu0 %v608
    %633 = vmatprep.subr.mxu0 0.0
    %634 = vmatpush1.msra.mxu0 %v609
    %635 = vmatprep.subr.mxu0 0.0
    %636 = vmatpush1.msra.mxu0 %v610
    %637 = vmatprep.subr.mxu0 0.0
    %638 = vmatpush1.msra.mxu0 %v611
    %639 = vmatprep.subr.mxu0 0.0
    %640 = vmatpush1.msra.mxu0 %v612
    %641 = vmatprep.subr.mxu0 0.0
    %642 = vmatpush1.msra.mxu0 %v613
    %643 = vmatprep.subr.mxu0 0.0
    %644 = vmatpush1.msra.mxu0 %v614
    %645 = vmatprep.subr.mxu0 0.0
    %646 = vmatpush1.msra.mxu0 %v615
    %647 = vmatprep.subr.mxu0 0.0
    %648 = vmatpush1.msra.mxu0 %v616
    %649 = vmatprep.subr.mxu0 0.0
    %650 = vmatpush1.msra.mxu0 0.0
    %651 = vmatprep.subr.mxu0 0.0
    %652 = vmatpush1.msra.mxu0 0.0
    %653 = vmatprep.subr.mxu0 0.0
    %654 = vmatpush1.msra.mxu0 0.0
    %655 = vmatprep.subr.mxu0 0.0
    %656 = vmatpush1.msra.mxu0 0.0
    %657 = vmatprep.subr.mxu0 0.0
    %658 = vmatpush1.msra.mxu0 0.0
    %659 = vmatprep.subr.mxu0 0.0
    %660 = vmatpush1.msra.mxu0 0.0
    %661 = vmatprep.subr.mxu0 0.0
    %662 = vmatpush1.msra.mxu0 0.0
    %663 = vmatprep.subr.mxu0 0.0
    %664 = vmatpush1.msra.mxu0 0.0
    %665 = vmatprep.subr.mxu0 0.0
    %666 = vmatpush1.msra.mxu0 0.0
    %667 = vmatprep.subr.mxu0 0.0
    %668 = vmatpush1.msra.mxu0 0.0
    %669 = vmatprep.subr.mxu0 0.0
    %670 = vmatpush1.msra.mxu0 0.0
    %671 = vmatprep.subr.mxu0 0.0
    %672 = vmatpush1.msra.mxu0 0.0
    %673 = vmatprep.subr.mxu0 0.0
    %674 = vmatpush1.msra.mxu0 0.0
    %675 = vmatprep.subr.mxu0 0.0
    %676 = vmatpush1.msra.mxu0 0.0
    %677 = vmatprep.subr.mxu0 0.0
    %678 = vmatpush1.msra.mxu0 0.0
    %679 = vmatprep.subr.mxu0 0.0
    %680 = vmatpush1.msra.mxu0 0.0
    %681 = vmatprep.mubr.f32.mxu0 0.0
    %682 = vmatmul.mubr.f32.gmra.mrb[0].mxu0 %v585
    %v683 = vpop.f32.mrb[0].mxu0
    %v684 = vadd.f32 0.0, %v683
    %v685 = vpop.f32.mrb[0].mxu0
    %686 = vmatprep.mubr.f32.mxu0 0.0
    %687 = vmatmul.mubr.f32.gmra.mrb[0].mxu0 %v586
    %v688 = vpop.f32.mrb[0].mxu0
    %v689 = vadd.f32 0.0, %v688
    %v690 = vpop.f32.mrb[0].mxu0
    %691 = vmatprep.mubr.f32.mxu0 0.0
    %692 = vmatmul.mubr.f32.gmra.mrb[0].mxu0 %v587
    %v693 = vpop.f32.mrb[0].mxu0
    %v694 = vadd.f32 0.0, %v693
    %v695 = vpop.f32.mrb[0].mxu0
    %696 = vmatprep.mubr.f32.mxu0 0.0
    %697 = vmatmul.mubr.f32.gmra.mrb[0].mxu0 %v588
    %v698 = vpop.f32.mrb[0].mxu0
    %v699 = vadd.f32 0.0, %v698
    %v700 = vpop.f32.mrb[0].mxu0
    %701 = vmatprep.mubr.f32.mxu0 0.0
    %702 = vmatmul.mubr.f32.gmra.mrb[0].mxu0 %v589
    %v703 = vpop.f32.mrb[0].mxu0
    %v704 = vadd.f32 0.0, %v703
    %v705 = vpop.f32.mrb[0].mxu0
    %706 = vmatprep.mubr.f32.mxu0 0.0
    %707 = vmatmul.mubr.f32.gmra.mrb[0].mxu0 %v590
    %v708 = vpop.f32.mrb[0].mxu0
    %v709 = vadd.f32 0.0, %v708
    %v710 = vpop.f32.mrb[0].mxu0
    %711 = vmatprep.mubr.f32.mxu0 0.0
    %712 = vmatmul.mubr.f32.gmra.mrb[0].mxu0 %v591
    %v713 = vpop.f32.mrb[0].mxu0
    %v714 = vadd.f32 0.0, %v713
    %v715 = vpop.f32.mrb[0].mxu0
    %716 = vmatprep.mubr.f32.mxu0 0.0
    %717 = vmatmul.mubr.f32.gmra.mrb[0].mxu0 %v592
    %v718 = vpop.f32.mrb[0].mxu0
    %v719 = vadd.f32 0.0, %v718
    %v720 = vpop.f32.mrb[0].mxu0
    %721 = vmatprep.mubr.f32.mxu0 0.0
    %722 = vmatmul.mubr.f32.gmra.mrb[0].mxu0 %v593
    %v723 = vpop.f32.mrb[0].mxu0
    %v724 = vadd.f32 0.0, %v723
    %v725 = vpop.f32.mrb[0].mxu0
    %726 = vmatprep.mubr.f32.mxu0 0.0
    %727 = vmatmul.mubr.f32.gmra.mrb[0].mxu0 %v594
    %v728 = vpop.f32.mrb[0].mxu0
    %v729 = vadd.f32 0.0, %v728
    %v730 = vpop.f32.mrb[0].mxu0
    %731 = vmatprep.mubr.f32.mxu0 0.0
    %732 = vmatmul.mubr.f32.gmra.mrb[0].mxu0 %v595
    %v733 = vpop.f32.mrb[0].mxu0
    %v734 = vadd.f32 0.0, %v733
    %v735 = vpop.f32.mrb[0].mxu0
    %736 = vmatprep.mubr.f32.mxu0 0.0
    %737 = vmatmul.mubr.f32.gmra.mrb[0].mxu0 %v596
    %v738 = vpop.f32.mrb[0].mxu0
    %v739 = vadd.f32 0.0, %v738
    %v740 = vpop.f32.mrb[0].mxu0
    %741 = vmatprep.mubr.f32.mxu0 0.0
    %742 = vmatmul.mubr.f32.gmra.mrb[0].mxu0 %v597
    %v743 = vpop.f32.mrb[0].mxu0
    %v744 = vadd.f32 0.0, %v743
    %v745 = vpop.f32.mrb[0].mxu0
    %746 = vmatprep.mubr.f32.mxu0 0.0
    %747 = vmatmul.mubr.f32.gmra.mrb[0].mxu0 %v598
    %v748 = vpop.f32.mrb[0].mxu0
    %v749 = vadd.f32 0.0, %v748
    %v750 = vpop.f32.mrb[0].mxu0
    %751 = vmatprep.mubr.f32.mxu0 0.0
    %752 = vmatmul.mubr.f32.gmra.mrb[0].mxu0 %v599
    %v753 = vpop.f32.mrb[0].mxu0
    %v754 = vadd.f32 0.0, %v753
    %v755 = vpop.f32.mrb[0].mxu0
    %756 = vmatprep.mubr.f32.mxu0 0.0
    %757 = vmatmul.mubr.f32.gmra.mrb[0].mxu0 %v600
    %v758 = vpop.f32.mrb[0].mxu0
    %v759 = vadd.f32 0.0, %v758
    %v760 = vpop.f32.mrb[0].mxu0
    %761 = vdwg.mxu0
    %762 = vst.msk [vmem:[%s4] sm:$0xff] %vm46, %v684
    %763 = vst.msk [vmem:[%s4 + $0x8] sm:$0xff] %vm46, %v689
    %764 = vst.msk [vmem:[%s4 + $0x10] sm:$0xff] %vm46, %v694
    %765 = vst.msk [vmem:[%s4 + $0x18] sm:$0xff] %vm46, %v699
    %766 = vst.msk [vmem:[%s4 + $0x20] sm:$0xff] %vm46, %v704
    %767 = vst.msk [vmem:[%s4 + $0x28] sm:$0xff] %vm46, %v709
    %768 = vst.msk [vmem:[%s4 + $0x30] sm:$0xff] %vm46, %v714
    %769 = vst.msk [vmem:[%s4 + $0x38] sm:$0xff] %vm46, %v719
    %770 = vst.msk [vmem:[%s4 + $0x40] sm:$0xff] %vm46, %v724
    %771 = vst.msk [vmem:[%s4 + $0x48] sm:$0xff] %vm46, %v729
    %772 = vst.msk [vmem:[%s4 + $0x50] sm:$0xff] %vm46, %v734
    %773 = vst.msk [vmem:[%s4 + $0x58] sm:$0xff] %vm46, %v739
    %774 = vst.msk [vmem:[%s4 + $0x60] sm:$0xff] %vm46, %v744
    %775 = vst.msk [vmem:[%s4 + $0x68] sm:$0xff] %vm46, %v749
    %776 = vst.msk [vmem:[%s4 + $0x70] sm:$0xff] %vm46, %v754
    %777 = vst.msk [vmem:[%s4 + $0x78] sm:$0xff] %vm46, %v759
    %v778 = vlaneseq
    %v779 = vshrl.u32 %v778, 7
    %v780 = vsub.s32 %v296, %v779
    %v781 = vrot.slane %v342, %v780
    %v782 = vadd.s32 %v296, 4294967288
    %v783 = vlaneseq
    %v784 = vshrl.u32 %v783, 7
    %v785 = vsub.s32 %v782, %v784
    %v786 = vrot.slane %v356, %v785
    %vm787 = vcmask 130112
    %v788 = vsel %vm787, %v786, %v781
    %v789 = vadd.s32 %v296, 4294967280
    %v790 = vlaneseq
    %v791 = vshrl.u32 %v790, 7
    %v792 = vsub.s32 %v789, %v791
    %v793 = vrot.slane %v370, %v792
    %vm794 = vcmask 195712
    %v795 = vsel %vm794, %v793, %v788
    %v796 = vadd.s32 %v296, 4294967272
    %v797 = vlaneseq
    %v798 = vshrl.u32 %v797, 7
    %v799 = vsub.s32 %v796, %v798
    %v800 = vrot.slane %v384, %v799
    %vm801 = vcmask 261312
    %v802 = vsel %vm801, %v800, %v795
    %v803 = vadd.s32 %v296, 4294967264
    %v804 = vlaneseq
    %v805 = vshrl.u32 %v804, 7
    %v806 = vsub.s32 %v803, %v805
    %v807 = vrot.slane %v398, %v806
    %vm808 = vcmask 326912
    %v809 = vsel %vm808, %v807, %v802
    %v810 = vadd.s32 %v296, 4294967256
    %v811 = vlaneseq
    %v812 = vshrl.u32 %v811, 7
    %v813 = vsub.s32 %v810, %v812
    %v814 = vrot.slane %v412, %v813
    %vm815 = vcmask 392512
    %v816 = vsel %vm815, %v814, %v809
    %v817 = vadd.s32 %v296, 4294967248
    %v818 = vlaneseq
    %v819 = vshrl.u32 %v818, 7
    %v820 = vsub.s32 %v817, %v819
    %v821 = vrot.slane %v426, %v820
    %vm822 = vcmask 458112
    %v823 = vsel %vm822, %v821, %v816
    %v824 = vadd.s32 %v296, 4294967240
    %v825 = vlaneseq
    %v826 = vshrl.u32 %v825, 7
    %v827 = vsub.s32 %v824, %v826
    %v828 = vrot.slane %v440, %v827
    %vm829 = vcmask 523712
    %v830 = vsel %vm829, %v828, %v823
    %v831 = vadd.s32 %v296, 4294967232
    %v832 = vlaneseq
    %v833 = vshrl.u32 %v832, 7
    %v834 = vsub.s32 %v831, %v833
    %v835 = vrot.slane %v454, %v834
    %vm836 = vcmask 589312
    %v837 = vsel %vm836, %v835, %v830
    %v838 = vadd.s32 %v296, 4294967224
    %v839 = vlaneseq
    %v840 = vshrl.u32 %v839, 7
    %v841 = vsub.s32 %v838, %v840
    %v842 = vrot.slane %v468, %v841
    %vm843 = vcmask 654912
    %v844 = vsel %vm843, %v842, %v837
    %v845 = vadd.s32 %v296, 4294967216
    %v846 = vlaneseq
    %v847 = vshrl.u32 %v846, 7
    %v848 = vsub.s32 %v845, %v847
    %v849 = vrot.slane %v482, %v848
    %vm850 = vcmask 720512
    %v851 = vsel %vm850, %v849, %v844
    %v852 = vadd.s32 %v296, 4294967208
    %v853 = vlaneseq
    %v854 = vshrl.u32 %v853, 7
    %v855 = vsub.s32 %v852, %v854
    %v856 = vrot.slane %v496, %v855
    %vm857 = vcmask 786112
    %v858 = vsel %vm857, %v856, %v851
    %v859 = vadd.s32 %v296, 4294967200
    %v860 = vlaneseq
    %v861 = vshrl.u32 %v860, 7
    %v862 = vsub.s32 %v859, %v861
    %v863 = vrot.slane %v510, %v862
    %vm864 = vcmask 851712
    %v865 = vsel %vm864, %v863, %v858
    %v866 = vadd.s32 %v296, 4294967192
    %v867 = vlaneseq
    %v868 = vshrl.u32 %v867, 7
    %v869 = vsub.s32 %v866, %v868
    %v870 = vrot.slane %v524, %v869
    %vm871 = vcmask 917312
    %v872 = vsel %vm871, %v870, %v865
    %v873 = vadd.s32 %v296, 4294967184
    %v874 = vlaneseq
    %v875 = vshrl.u32 %v874, 7
    %v876 = vsub.s32 %v873, %v875
    %v877 = vrot.slane %v538, %v876
    %vm878 = vcmask 982912
    %v879 = vsel %vm878, %v877, %v872
    %v880 = vadd.s32 %v296, 4294967176
    %v881 = vlaneseq
    %v882 = vshrl.u32 %v881, 7
    %v883 = vsub.s32 %v880, %v882
    %v884 = vrot.slane %v552, %v883
    %vm885 = vcmask 1048512
    %v886 = vsel %vm885, %v884, %v879
    %887 = vst [vmem:[#allocation2] sm:$0x1] %v886
    %v888 = vsub.f32 %v684, %v22
    %v889 = vsub.f32 %v689, %v23
    %v890 = vsub.f32 %v694, %v24
    %v891 = vsub.f32 %v699, %v25
    %v892 = vsub.f32 %v704, %v26
    %v893 = vsub.f32 %v709, %v27
    %v894 = vsub.f32 %v714, %v28
    %v895 = vsub.f32 %v719, %v29
    %v896 = vsub.f32 %v724, %v30
    %v897 = vsub.f32 %v729, %v31
    %v898 = vsub.f32 %v734, %v32
    %v899 = vsub.f32 %v739, %v33
    %v900 = vsub.f32 %v744, %v34
    %v901 = vsub.f32 %v749, %v35
    %v902 = vsub.f32 %v754, %v36
    %v903 = vsub.f32 %v759, %v37
    %v904 = vmul.f32 %v888, %v888
    %v905 = vmul.f32 %v889, %v889
    %v906 = vmul.f32 %v890, %v890
    %v907 = vmul.f32 %v891, %v891
    %v908 = vmul.f32 %v892, %v892
    %v909 = vmul.f32 %v893, %v893
    %v910 = vmul.f32 %v894, %v894
    %v911 = vmul.f32 %v895, %v895
    %v912 = vmul.f32 %v896, %v896
    %v913 = vmul.f32 %v897, %v897
    %v914 = vmul.f32 %v898, %v898
    %v915 = vmul.f32 %v899, %v899
    %v916 = vmul.f32 %v900, %v900
    %v917 = vmul.f32 %v901, %v901
    %v918 = vmul.f32 %v902, %v902
    %v919 = vmul.f32 %v903, %v903
    %v920 = vsel %vm46, %v904, 0.0
    %v921 = vsel %vm46, %v905, 0.0
    %v922 = vadd.f32 %v920, %v921
    %v923 = vsel %vm46, %v906, 0.0
    %v924 = vadd.f32 %v922, %v923
    %v925 = vsel %vm46, %v907, 0.0
    %v926 = vadd.f32 %v924, %v925
    %v927 = vsel %vm46, %v908, 0.0
    %v928 = vadd.f32 %v926, %v927
    %v929 = vsel %vm46, %v909, 0.0
    %v930 = vadd.f32 %v928, %v929
    %v931 = vsel %vm46, %v910, 0.0
    %v932 = vadd.f32 %v930, %v931
    %v933 = vsel %vm46, %v911, 0.0
    %v934 = vadd.f32 %v932, %v933
    %v935 = vsel %vm46, %v912, 0.0
    %v936 = vadd.f32 %v934, %v935
    %v937 = vsel %vm46, %v913, 0.0
    %v938 = vadd.f32 %v936, %v937
    %v939 = vsel %vm46, %v914, 0.0
    %v940 = vadd.f32 %v938, %v939
    %v941 = vsel %vm46, %v915, 0.0
    %v942 = vadd.f32 %v940, %v941
    %v943 = vsel %vm46, %v916, 0.0
    %v944 = vadd.f32 %v942, %v943
    %v945 = vsel %vm46, %v917, 0.0
    %v946 = vadd.f32 %v944, %v945
    %v947 = vsel %vm46, %v918, 0.0
    %v948 = vadd.f32 %v946, %v947
    %v949 = vsel %vm46, %v919, 0.0
    %v950 = vadd.f32 %v948, %v949
    %v951 = vrot.slane %v950, 4
    %v952 = vadd.f32 %v950, %v951
    %v953 = vrot.slane %v952, 2
    %v954 = vadd.f32 %v952, %v953
    %v955 = vrot.slane %v954, 1
    %v956 = vadd.f32 %v954, %v955
    %vm957 = vcmask 516096
    %958 = vst.msk [vmem:[#allocation4] sm:$0x1] %vm957, %v956
    // Predicated region
    $region18: #{tpu_custom_call.1} parent=1 // pred_check
      _
    $region19: #{tpu_custom_call.1} parent=1 // pred_check_branch
      %960 = sbr.rel (0) target = $region21
    $region20: #{tpu_custom_call.1} parent=1 // pred_region
      _
    $region21: #{tpu_custom_call.1} parent=1 // pred_fallthru
      _
    // Predicated region
    $region22: #{tpu_custom_call.1} parent=1 // pred_check
      _
    $region23: #{tpu_custom_call.1} parent=1 // pred_check_branch
      %962 = sbr.rel (0) target = $region25
    $region24: #{tpu_custom_call.1} parent=1 // pred_region
      %s964 = ssub.s32 16, 16
      %965 = vsyncadd [#allocation3], %s964
      %s967 = sshll.u32 [#allocation2], 4
      %s968 = int_to_ptr.vmem [resolvable:$true] %s967
      %970 = dma.vmem_to_hbm [thread:$0]  %s968, 16, %s5, [#allocation3]
    $region25: #{tpu_custom_call.1} parent=1 // pred_fallthru
      _
    // Predicated region
    $region26: #{tpu_custom_call.1} parent=1 // pred_check
      _
    $region27: #{tpu_custom_call.1} parent=1 // pred_check_branch
      %972 = sbr.rel (0) target = $region29
    $region28: #{tpu_custom_call.1} parent=1 // pred_region
      %s974 = ssub.s32 16, 16
      %975 = vsyncadd [#allocation5], %s974
      %s977 = sshll.u32 [#allocation4], 4
      %s978 = int_to_ptr.vmem [resolvable:$true] %s977
      %980 = dma.vmem_to_hbm [thread:$0]  %s978, 16, %s6, [#allocation5]
    $region29: #{tpu_custom_call.1} parent=1 // pred_fallthru
      _
    // Predicated region
    $region30: #{tpu_custom_call.1} parent=1 // pred_check
      _
    $region31: #{tpu_custom_call.1} parent=1 // pred_check_branch
      %982 = sbr.rel (0) target = $region33
    $region32: #{tpu_custom_call.1} parent=1 // pred_region
      _
    $region33: #{tpu_custom_call.1} parent=1 // pred_fallthru
      _
    // Predicated region
    $region34: #{tpu_custom_call.1} parent=1 // pred_check
      _
    $region35: #{tpu_custom_call.1} parent=1 // pred_check_branch
      %984 = sbr.rel (0) target = $region37
    $region36: #{tpu_custom_call.1} parent=1 // pred_region
      %985 = dma.done [#allocation3], 16
    $region37: #{tpu_custom_call.1} parent=1 // pred_fallthru
      _
    // Predicated region
    $region38: #{tpu_custom_call.1} parent=1 // pred_check
      _
    $region39: #{tpu_custom_call.1} parent=1 // pred_check_branch
      %987 = sbr.rel (0) target = $region41
    $region40: #{tpu_custom_call.1} parent=1 // pred_region
      %988 = dma.done [#allocation5], 16
    $region41: #{tpu_custom_call.1} parent=1 // pred_fallthru
      _
    %989 = vsyncpa [#allocation3], 1
    %990 = vsyncpa [#allocation5], 1

</llo_original>
